<compile_context>
chip_gen: v7x
topology: tpu7x:2x2x1
jax: 0.10.0
libtpu: 0.0.40
codegen_flags: <defaults>
</compile_context>

<pallas_src>
import functools

import jax
import jax.numpy as jnp
from jax import lax
from jax.experimental import pallas as pl
from jax.experimental.pallas import tpu as pltpu


def _round_up(a: int, b: int) -> int:
    return -(-a // b) * b


def _pick_cout_tile(cout_p: int) -> int:
    """Cout tile: full if <=256, else the largest nice divisor."""
    if cout_p <= 256:
        return cout_p
    for t in (256, 128, 64, 32, 16, 8):
        if cout_p % t == 0:
            return t
    return cout_p


# ---------------------------------------------------------------------------
# Pallas kernel: one (batch n, Cout-tile co) grid point.
#   conv  = sum over shifts of  W_shift[(tc, C')] @ x_flat[(C', L_pad)]   (MXU)
#   then InstanceNorm over the Ho*Wo valid positions (masked) + LeakyReLU.
# ---------------------------------------------------------------------------
def disc_block_kernel(x_ref, w_ref, aux_ref, o_ref, *, shift_offs, norm,
                      num_co, tc, inv_hw, eps, neg_slope):
    # x_ref  : (Cp, L_in)            bf16  phase-split, flattened input (batch n)
    # w_ref  : (n_shifts, Coutp, Cp) bf16  all shift matrices, resident (1 DMA)
    # aux_ref: (1, L_pad) f32 valid-column mask   if norm
    #          (Coutp, 1) f32 conv bias           if not norm
    # o_ref  : (tc, L_pad)           bf16  output tile (flattened (Ho, Wq))
    L_pad = o_ref.shape[-1]

    if num_co == 1:
        c0 = 0
    else:
        c0 = pl.multiple_of(pl.program_id(1) * tc, tc)

    # Convolution as unrolled shift matmuls over contiguous (unit-stride)
    # slices of the phase-split input; f32 accumulation on the MXU.
    y = None
    for i, off in enumerate(shift_offs):
        w_i = w_ref[i] if num_co == 1 else w_ref[i, pl.ds(c0, tc), :]
        x_i = x_ref[:, off:off + L_pad]
        d = jnp.dot(w_i, x_i, preferred_element_type=jnp.float32)
        y = d if y is None else y + d

    if norm:
        # Bias omitted: a per-channel constant cancels under InstanceNorm.
        # Masked two-pass stats over the Ho*Wo valid positions (garbage
        # columns from the flattened-width trick are excluded, then cropped).
        m = aux_ref[...]                                   # (1, L_pad) 1/0
        mean = jnp.sum(y * m, axis=1, keepdims=True) * inv_hw
        cen = (y - mean) * m
        var = jnp.sum(cen * cen, axis=1, keepdims=True) * inv_hw
        y = (y - mean) * lax.rsqrt(var + eps)              # rsqrt -> EUP slot
    else:
        b = aux_ref[...] if num_co == 1 else aux_ref[pl.ds(c0, tc), :]
        y = y + b

    y = jnp.maximum(y, neg_slope * y)                      # LeakyReLU(0.2)
    o_ref[...] = y.astype(o_ref.dtype)


# ---------------------------------------------------------------------------
# Host wrapper
# ---------------------------------------------------------------------------
def disc_block(x, weight, bias, *, stride: int, padding: int, norm: bool = True,
               eps: float = 1e-5, neg_slope: float = 0.2,
               out_dtype=jnp.bfloat16):
    """x: [N, Cin, H, W] (NCHW).  weight: [Cout, Cin, KH, KW].  bias: [Cout]."""
    N, Cin, H, W = x.shape
    Cout, Cin_w, KH, KW = weight.shape
    assert Cin_w == Cin
    s, p = stride, padding

    Ho = (H + 2 * p - KH) // s + 1
    Wo = (W + 2 * p - KW) // s + 1
    Khp, Kwp = -(-KH // s), -(-KW // s)        # kernel extent after phase split
    n_shifts = Khp * Kwp

    # Flattened-spatial geometry: output rows of width Wq (Wo valid columns +
    # Kwp-1 "wrap" garbage columns), so every shift slice is contiguous.
    Wq = Wo + Kwp - 1
    L_valid = Ho * Wq
    L_pad = _round_up(L_valid, 128)            # lane-dense output stores
    max_off = (Khp - 1) * Wq + (Kwp - 1)
    L_in = _round_up(L_pad + max_off, 128)
    Hq = -(-L_in // Wq)
    Hp, Wp = s * Hq, s * Wq

    Cgrp = s * s * Cin                         # phase-expanded channel count
    Cp = _round_up(Cgrp, 8)
    Coutp = _round_up(Cout, 8)
    tc = _pick_cout_tile(Coutp)
    num_co = Coutp // tc

    # --- glue: pad + phase split (one |x|-sized bf16 pass; no K^2 blowup) ---
    xb = x.astype(jnp.bfloat16)
    pad_b = max(0, Hp - p - H)
    pad_r = max(0, Wp - p - W)
    x_sp = jnp.pad(xb, ((0, 0), (0, 0), (p, pad_b), (p, pad_r)))[:, :, :Hp, :Wp]
    x_ph = x_sp.reshape(N, Cin, Hq, s, Wq, s).transpose(0, 3, 5, 1, 2, 4)
    x_flat = x_ph.reshape(N, Cgrp, Hq * Wq)[:, :, :L_in]     # (N, Cgrp, L_in)
    if Cp > Cgrp:
        x_flat = jnp.pad(x_flat, ((0, 0), (0, Cp - Cgrp), (0, 0)))

    # --- weights: (n_shifts, Coutp, Cp) bf16, one resident VMEM block --------
    wf = weight.astype(jnp.float32)
    shift_mats = []
    for dh in range(Khp):
        for dw in range(Kwp):
            cols = []
            for ph in range(s):
                for pw in range(s):
                    kh, kw = s * dh + ph, s * dw + pw
                    if kh < KH and kw < KW:
                        cols.append(wf[:, :, kh, kw])         # (Cout, Cin)
                    else:
                        cols.append(jnp.zeros((Cout, Cin), jnp.float32))
            shift_mats.append(jnp.concatenate(cols, axis=1))  # (Cout, Cgrp)
    w_all = jnp.stack(shift_mats, axis=0)                     # (n_shifts, Cout, Cgrp)
    w_all = jnp.pad(w_all, ((0, 0), (0, Coutp - Cout),
                            (0, Cp - Cgrp))).astype(jnp.bfloat16)
    shift_offs = tuple(dh * Wq + dw for dh in range(Khp) for dw in range(Kwp))

    # --- aux operand: valid-column mask (norm) or bias (no norm) -------------
    if norm:
        lane = jnp.arange(L_pad)
        valid = ((lane % Wq) < Wo) & (lane < L_valid)
        aux = valid.astype(jnp.float32).reshape(1, L_pad)
        aux_spec = pl.BlockSpec((1, L_pad), lambda n, c: (0, 0))
    else:
        aux = jnp.pad(bias.astype(jnp.float32),
                      (0, Coutp - Cout)).reshape(Coutp, 1)
        aux_spec = pl.BlockSpec((Coutp, 1), lambda n, c: (0, 0))

    kern = functools.partial(
        disc_block_kernel, shift_offs=shift_offs, norm=norm, num_co=num_co,
        tc=tc, inv_hw=1.0 / float(Ho * Wo), eps=eps, neg_slope=neg_slope)

    flops = 2 * N * Cout * Cin * KH * KW * Ho * Wo
    bytes_accessed = int(N * Cp * L_in * 2 + n_shifts * Coutp * Cp * 2
                         + N * Coutp * L_pad * 2 + aux.size * 4)

    out_flat = pl.pallas_call(
        kern,
        out_shape=jax.ShapeDtypeStruct((N, Coutp, L_pad), out_dtype),
        grid_spec=pltpu.PrefetchScalarGridSpec(
            num_scalar_prefetch=0,
            grid=(N, num_co),
            in_specs=[
                # full per-batch input block; re-DMA only when n changes
                pl.BlockSpec((pl.Squeezed(), Cp, L_in), lambda n, c: (n, 0, 0)),
                # full weight block; constant index -> DMA'd once per call
                pl.BlockSpec((n_shifts, Coutp, Cp), lambda n, c: (0, 0, 0)),
                aux_spec,
            ],
            out_specs=pl.BlockSpec((pl.Squeezed(), tc, L_pad),
                                   lambda n, c: (n, c, 0)),
        ),
        compiler_params=pltpu.CompilerParams(
            dimension_semantics=("parallel", "parallel")),
        cost_estimate=pl.CostEstimate(flops=flops,
                                      transcendentals=N * Cout,
                                      bytes_accessed=bytes_accessed),
    )(x_flat, w_all, aux)

    # Crop garbage columns / padding; NCHW via pure reshape + narrow slice.
    out = out_flat[:, :Cout, :L_valid].reshape(N, Cout, Ho, Wq)[:, :, :, :Wo]
    return out


# ---------------------------------------------------------------------------
# Pure-JAX reference (correctness sanity check)
# ---------------------------------------------------------------------------
def disc_block_ref(x, weight, bias, *, stride, padding, norm=True, eps=1e-5,
                   neg_slope=0.2):
    y = lax.conv_general_dilated(
        x.astype(jnp.float32), weight.astype(jnp.float32),
        window_strides=(stride, stride),
        padding=((padding, padding), (padding, padding)),
        dimension_numbers=("NCHW", "OIHW", "NCHW"))
    y = y + bias.reshape(1, -1, 1, 1)
    if norm:
        mean = jnp.mean(y, axis=(2, 3), keepdims=True)
        var = jnp.mean((y - mean) ** 2, axis=(2, 3), keepdims=True)
        y = (y - mean) * lax.rsqrt(var + eps)
    return jnp.where(y >= 0, y, neg_slope * y)


if __name__ == "__main__":
    key = jax.random.PRNGKey(0)
    k_x, k_w, k_b = jax.random.split(key, 3)

    # DiscBlock(in_features=4, out_features=8, kernel_size=4, stride=2, padding=1)
    N, Cin, H, W = 2, 4, 16, 16
    Cout, K, stride, padding = 8, 4, 2, 1

    x = jax.random.normal(k_x, (N, Cin, H, W), dtype=jnp.float32)
    weight = jax.random.normal(k_w, (Cout, Cin, K, K), dtype=jnp.float32) * 0.1
    bias = jax.random.normal(k_b, (Cout,), dtype=jnp.float32) * 0.1

    # Reference uses bf16-rounded operands (the kernel feeds bf16 to the MXU).
    x_q = x.astype(jnp.bfloat16).astype(jnp.float32)
    w_q = weight.astype(jnp.bfloat16).astype(jnp.float32)

    for norm in (True, False):
        out = disc_block(x, weight, bias, stride=stride, padding=padding,
                         norm=norm)
        out = jax.block_until_ready(out)
        ref = disc_block_ref(x_q, w_q, bias, stride=stride, padding=padding,
                             norm=norm)
        assert out.shape == (N, Cout, H // stride, W // stride), out.shape
        assert jnp.allclose(out.astype(jnp.float32), ref, atol=3e-2, rtol=3e-2), \
            f"mismatch vs reference (norm={norm})"

    print("KERNEL_OK")
</pallas_src>

<mosaic_0001>
module attributes {stable_mosaic.version = 11 : i64} {
  func.func @disc_block_kernel(%arg0: i32, %arg1: i32, %arg2: memref<1x16x256xbf16, #tpu.memory_space<vmem>>, %arg3: memref<4x8x16xbf16, #tpu.memory_space<vmem>>, %arg4: memref<1x128xf32, #tpu.memory_space<vmem>>, %arg5: memref<1x8x128xbf16, #tpu.memory_space<vmem>>) attributes {dimension_semantics = [#tpu.dimension_semantics<parallel>, #tpu.dimension_semantics<parallel>], iteration_bounds = array<i64: 2, 1>, scalar_prefetch = 0 : i64, scratch_operands = 0 : i64, tpu.core_type = #tpu.core_type<tc>, window_params = [{transform_indices = @transform_0, window_bounds = array<i64: 1, 16, 256>}, {pipeline_mode = #tpu.pipeline_mode<synchronous>, transform_indices = @transform_1, window_bounds = array<i64: 4, 8, 16>}, {pipeline_mode = #tpu.pipeline_mode<synchronous>, transform_indices = @transform_2, window_bounds = array<i64: 1, 128>}, {transform_indices = @transform_3, window_bounds = array<i64: 1, 8, 128>}]} {
    %c0 = arith.constant 0 : index
    %c0_0 = arith.constant 0 : index
    %c0_1 = arith.constant 0 : index
    %0 = vector.load %arg3[%c0, %c0_0, %c0_1] : memref<4x8x16xbf16, #tpu.memory_space<vmem>>, vector<1x8x16xbf16>
    %1 = vector.shape_cast %0 : vector<1x8x16xbf16> to vector<8x16xbf16>
    %c0_2 = arith.constant 0 : index
    %c0_3 = arith.constant 0 : index
    %c0_4 = arith.constant 0 : index
    %2 = vector.load %arg2[%c0_2, %c0_3, %c0_4] : memref<1x16x256xbf16, #tpu.memory_space<vmem>>, vector<1x16x128xbf16>
    %3 = vector.shape_cast %2 : vector<1x16x128xbf16> to vector<16x128xbf16>
    %cst = arith.constant dense<0.000000e+00> : vector<8x128xf32>
    %4 = tpu.matmul %1, %3, %cst {dimension_numbers = #tpu.dot_dimension_numbers<[1], [0], [0], [1], [0, 0, 1, 1], [], []>} : vector<8x16xbf16>, vector<16x128xbf16>, vector<8x128xf32> -> vector<8x128xf32>
    %c1 = arith.constant 1 : index
    %c0_5 = arith.constant 0 : index
    %c0_6 = arith.constant 0 : index
    %5 = vector.load %arg3[%c1, %c0_5, %c0_6] : memref<4x8x16xbf16, #tpu.memory_space<vmem>>, vector<1x8x16xbf16>
    %6 = vector.shape_cast %5 : vector<1x8x16xbf16> to vector<8x16xbf16>
    %c0_7 = arith.constant 0 : index
    %c0_8 = arith.constant 0 : index
    %c1_9 = arith.constant 1 : index
    %7 = vector.load %arg2[%c0_7, %c0_8, %c1_9] : memref<1x16x256xbf16, #tpu.memory_space<vmem>>, vector<1x16x128xbf16>
    %8 = vector.shape_cast %7 : vector<1x16x128xbf16> to vector<16x128xbf16>
    %cst_10 = arith.constant dense<0.000000e+00> : vector<8x128xf32>
    %9 = tpu.matmul %6, %8, %cst_10 {dimension_numbers = #tpu.dot_dimension_numbers<[1], [0], [0], [1], [0, 0, 1, 1], [], []>} : vector<8x16xbf16>, vector<16x128xbf16>, vector<8x128xf32> -> vector<8x128xf32>
    %10 = arith.addf %4, %9 : vector<8x128xf32>
    %c2 = arith.constant 2 : index
    %c0_11 = arith.constant 0 : index
    %c0_12 = arith.constant 0 : index
    %11 = vector.load %arg3[%c2, %c0_11, %c0_12] : memref<4x8x16xbf16, #tpu.memory_space<vmem>>, vector<1x8x16xbf16>
    %12 = vector.shape_cast %11 : vector<1x8x16xbf16> to vector<8x16xbf16>
    %c0_13 = arith.constant 0 : index
    %c0_14 = arith.constant 0 : index
    %c9 = arith.constant 9 : index
    %13 = vector.load %arg2[%c0_13, %c0_14, %c9] : memref<1x16x256xbf16, #tpu.memory_space<vmem>>, vector<1x16x128xbf16>
    %14 = vector.shape_cast %13 : vector<1x16x128xbf16> to vector<16x128xbf16>
    %cst_15 = arith.constant dense<0.000000e+00> : vector<8x128xf32>
    %15 = tpu.matmul %12, %14, %cst_15 {dimension_numbers = #tpu.dot_dimension_numbers<[1], [0], [0], [1], [0, 0, 1, 1], [], []>} : vector<8x16xbf16>, vector<16x128xbf16>, vector<8x128xf32> -> vector<8x128xf32>
    %16 = arith.addf %10, %15 : vector<8x128xf32>
    %c3 = arith.constant 3 : index
    %c0_16 = arith.constant 0 : index
    %c0_17 = arith.constant 0 : index
    %17 = vector.load %arg3[%c3, %c0_16, %c0_17] : memref<4x8x16xbf16, #tpu.memory_space<vmem>>, vector<1x8x16xbf16>
    %18 = vector.shape_cast %17 : vector<1x8x16xbf16> to vector<8x16xbf16>
    %c0_18 = arith.constant 0 : index
    %c0_19 = arith.constant 0 : index
    %c10 = arith.constant 10 : index
    %19 = vector.load %arg2[%c0_18, %c0_19, %c10] : memref<1x16x256xbf16, #tpu.memory_space<vmem>>, vector<1x16x128xbf16>
    %20 = vector.shape_cast %19 : vector<1x16x128xbf16> to vector<16x128xbf16>
    %cst_20 = arith.constant dense<0.000000e+00> : vector<8x128xf32>
    %21 = tpu.matmul %18, %20, %cst_20 {dimension_numbers = #tpu.dot_dimension_numbers<[1], [0], [0], [1], [0, 0, 1, 1], [], []>} : vector<8x16xbf16>, vector<16x128xbf16>, vector<8x128xf32> -> vector<8x128xf32>
    %22 = arith.addf %16, %21 : vector<8x128xf32>
    %c0_21 = arith.constant 0 : index
    %c0_22 = arith.constant 0 : index
    %23 = vector.load %arg4[%c0_21, %c0_22] : memref<1x128xf32, #tpu.memory_space<vmem>>, vector<1x128xf32>
    %24 = vector.broadcast %23 : vector<1x128xf32> to vector<8x128xf32>
    %25 = arith.mulf %22, %24 : vector<8x128xf32>
    %cst_23 = arith.constant dense<0.000000e+00> : vector<8xf32>
    %26 = vector.multi_reduction <add>, %25, %cst_23 [1] : vector<8x128xf32> to vector<8xf32>
    %27 = vector.shape_cast %26 : vector<8xf32> to vector<8x1xf32>
    %cst_24 = arith.constant 1.562500e-02 : f32
    %28 = vector.broadcast %cst_24 : f32 to vector<8x1xf32>
    %29 = arith.mulf %27, %28 : vector<8x1xf32>
    %30 = vector.broadcast %29 : vector<8x1xf32> to vector<8x128xf32>
    %31 = arith.subf %22, %30 : vector<8x128xf32>
    %32 = vector.broadcast %23 : vector<1x128xf32> to vector<8x128xf32>
    %33 = arith.mulf %31, %32 : vector<8x128xf32>
    %34 = arith.mulf %33, %33 : vector<8x128xf32>
    %cst_25 = arith.constant dense<0.000000e+00> : vector<8xf32>
    %35 = vector.multi_reduction <add>, %34, %cst_25 [1] : vector<8x128xf32> to vector<8xf32>
    %36 = vector.shape_cast %35 : vector<8xf32> to vector<8x1xf32>
    %cst_26 = arith.constant 1.562500e-02 : f32
    %37 = vector.broadcast %cst_26 : f32 to vector<8x1xf32>
    %38 = arith.mulf %36, %37 : vector<8x1xf32>
    %39 = vector.broadcast %29 : vector<8x1xf32> to vector<8x128xf32>
    %40 = arith.subf %22, %39 : vector<8x128xf32>
    %cst_27 = arith.constant 9.99999974E-6 : f32
    %41 = vector.broadcast %cst_27 : f32 to vector<8x1xf32>
    %42 = arith.addf %38, %41 : vector<8x1xf32>
    %43 = math.rsqrt %42 : vector<8x1xf32>
    %44 = vector.broadcast %43 : vector<8x1xf32> to vector<8x128xf32>
    %45 = arith.mulf %40, %44 : vector<8x128xf32>
    %cst_28 = arith.constant 2.000000e-01 : f32
    %46 = vector.broadcast %cst_28 : f32 to vector<8x128xf32>
    %47 = arith.mulf %46, %45 : vector<8x128xf32>
    %48 = arith.maximumf %45, %47 : vector<8x128xf32>
    %49 = arith.truncf %48 : vector<8x128xf32> to vector<8x128xbf16>
    %c0_29 = arith.constant 0 : index
    %c0_30 = arith.constant 0 : index
    %c0_31 = arith.constant 0 : index
    %50 = vector.load %arg5[%c0_29, %c0_30, %c0_31] : memref<1x8x128xbf16, #tpu.memory_space<vmem>>, vector<1x8x128xbf16>
    %51 = vector.shape_cast %50 : vector<1x8x128xbf16> to vector<8x128xbf16>
    %52 = vector.shape_cast %49 : vector<8x128xbf16> to vector<1x8x128xbf16>
    tpu.vector_store %arg5[%c0_29, %c0_30, %c0_31], %52 {strides = array<i32>} : memref<1x8x128xbf16, #tpu.memory_space<vmem>>, vector<1x8x128xbf16>,
    return
  }
  func.func @transform_0(%arg0: i32, %arg1: i32) -> (i32, i32, i32) {
    %c0_i32 = arith.constant 0 : i32
    %c0_i32_0 = arith.constant 0 : i32
    %c0_i32_1 = arith.constant 0 : i32
    return %arg0, %c0_i32, %c0_i32_0 : i32, i32, i32
  }
  func.func @transform_1(%arg0: i32, %arg1: i32) -> (i32, i32, i32) {
    %c0_i32 = arith.constant 0 : i32
    %c0_i32_0 = arith.constant 0 : i32
    %c0_i32_1 = arith.constant 0 : i32
    %c0_i32_2 = arith.constant 0 : i32
    return %c0_i32, %c0_i32_0, %c0_i32_1 : i32, i32, i32
  }
  func.func @transform_2(%arg0: i32, %arg1: i32) -> (i32, i32) {
    %c0_i32 = arith.constant 0 : i32
    %c0_i32_0 = arith.constant 0 : i32
    %c0_i32_1 = arith.constant 0 : i32
    return %c0_i32, %c0_i32_0 : i32, i32
  }
  func.func @transform_3(%arg0: i32, %arg1: i32) -> (i32, i32, i32) {
    %c0_i32 = arith.constant 0 : i32
    %c0_i32_0 = arith.constant 0 : i32
    return %arg0, %arg1, %c0_i32 : i32, i32, i32
  }
}

</mosaic_0001>

<llo_original>
// kernel: tpu_custom_call.1
$region0: #{tpu_custom_call.1}
  #allocation0 [shape = 'u32[]', space=smem, size = 0x4, offset = 0x4, fixed_abs, tag = 'smem constant byte address 0x4 - core index']
  #allocation1 [shape = 'u32[144,128]{1,0:T(1,128)}', space=vmem, size = 0x12000, scoped, tag = 'internal scratch']
  %s0 = inlined_call_operand.hbm [shape: bf16[2,16,256], index: 0, kind: input, shape index: {}]
  %s1 = inlined_call_operand.hbm [shape: bf16[4,8,16], index: 1, kind: input, shape index: {}]
  %s2 = inlined_call_operand.vmem [shape: f32[1,128], index: 2, kind: input, shape index: {}]
  %s3 = inlined_call_operand.hbm [shape: bf16[2,8,128], index: 3, kind: output, shape index: {}]
  %s4 = sld [smem:[#allocation0]]
  $region53: #{tpu_custom_call.1} parent=0
    _
  %s6 = ssub.s32 1, %s4
  %s7 = scalar_select 0, %s6, %s4
  $region1: #{tpu_custom_call.1} parent=0
    #allocation2 [shape = 'u8[16384]{0}', space=vmem, size = 0x4000, scoped, tag = 'input window, operand 0']
    #allocation3 [shape = 's32[2]{0}', space=sflag, size = 0x8, scoped, tag = 'scoped memory for tpu_custom_call.1']
    #allocation4 [shape = 's32[2]{0}', space=sflag, size = 0x8, scoped, tag = 'scoped memory for tpu_custom_call.1']
    #allocation5 [shape = 'u8[8192]{0}', space=vmem, size = 0x2000, scoped, tag = 'input window, operand 1, single buffered']
    #allocation6 [shape = 's32[1]{0}', space=sflag, size = 0x4, scoped, tag = 'scoped memory for tpu_custom_call.1']
    #allocation7 [shape = 'u8[4096]{0}', space=vmem, size = 0x1000, scoped, tag = 'output window, operand 0']
    %8 = vsyncpa [#allocation3], 0
    %s9 = scalar_lea.sflag [#allocation3], 1
    %10 = vsyncpa %s9, 0
    %11 = vsyncpa [#allocation6], 0
    %12 = vsyncpa [#allocation4], 0
    %s13 = scalar_lea.sflag [#allocation4], 1
    %14 = vsyncpa %s13, 0
    loop: start=0, step=1, limit=4
    $region2: #{tpu_custom_call.1} parent=1 // loop_pre_header
      _
    $region3: #{tpu_custom_call.1} parent=1 // loop_header
      %s16 = sphi 0, %s20
      %p17 = scmp.ge.s32.totalorder %s16, 4
      %s23 = sphi 0, %s35
      %s24 = sphi 0, %s31
      %s25 = sphi 0, %s23
      %s26 = sphi 0, %s24
      %s27 = sphi 0, %s25
      %s28 = sphi 0, %s26
      %s38 = sphi 0, %s40
      %s41 = sphi 0, %s38
      %s42 = sphi 0, %s41
      %s58 = sphi 0, %s42
      %s62 = sphi 0, %s62
      %s64 = sphi 0, %s62
      %s65 = sphi 0, %s64
      %s79 = sphi 0, %s65
      %s83 = sphi 0, %s83
      %s85 = sphi 0, %s83
      %s86 = sphi 0, %s85
      %s100 = sphi 0, %s86
      %s108 = sphi 0, %s110
      %s111 = sphi 0, %s108
      %s112 = sphi 0, %s111
      %s128 = sphi 0, %s112
    $region4: #{tpu_custom_call.1} parent=1 // loop_header_branch
      %19 = sbr.rel (%p17) target = $region8
    $region5: #{tpu_custom_call.1} parent=1 // loop_body
      %s21 = ssub.s32 %s16, 1
      %s22 = ssub.s32 %s16, 2
      %s29 = sadd.s32 1, %s24
      %p30 = scmp.ge.s32.totalorder %s29, 1
      %s31 = scalar_select %p30, 0, %s29
      %s32 = sadd.s32 1, %s23
      %s33 = scalar_select %p30, %s32, %s23
      %p34 = scmp.ge.s32.totalorder %s33, 2
      %s35 = scalar_select %p34, 0, %s33
      %s36 = ssub.s32 %s23, %s35
      %p37 = scmp.eq.s32.totalorder %s36, 0
      %s39 = sadd.s32 %s38, 1
      %s40 = scalar_select %p37, %s38, %s39
      %p43 = pneg %p37
      %p44 = scmp.eq.s32.totalorder %s16, 1
      %p45 = por %p43, %p44
      %p46 = scmp.ne.s32.totalorder %s38, %s41
      %p47 = scmp.eq.s32.totalorder %s16, 0
      %p48 = por %p46, %p47
      %p49 = scmp.ne.s32.totalorder %s38, %s41
      %p50 = scmp.eq.s32.totalorder %s21, 1
      %p51 = por %p49, %p50
      %p52 = scmp.ne.s32.totalorder %s41, %s42
      %p53 = scmp.eq.s32.totalorder %s21, 0
      %p54 = por %p52, %p53
      %p55 = scmp.ne.s32.totalorder %s41, %s42
      %p56 = scmp.eq.s32.totalorder %s22, 1
      %p57 = por %p55, %p56
      %p59 = scmp.ne.s32.totalorder %s42, %s58
      %p60 = scmp.eq.s32.totalorder %s22, 0
      %p61 = por %p59, %p60
      %s63 = sadd.s32 %s62, 1
      %p66 = scmp.eq.s32.totalorder %s16, 1
      %p67 = scmp.ne.s32.totalorder %s62, %s64
      %p68 = scmp.eq.s32.totalorder %s16, 0
      %p69 = por %p67, %p68
      %p70 = scmp.ne.s32.totalorder %s62, %s64
      %p71 = scmp.eq.s32.totalorder %s21, 1
      %p72 = por %p70, %p71
      %p73 = scmp.ne.s32.totalorder %s64, %s65
      %p74 = scmp.eq.s32.totalorder %s21, 0
      %p75 = por %p73, %p74
      %p76 = scmp.ne.s32.totalorder %s64, %s65
      %p77 = scmp.eq.s32.totalorder %s22, 1
      %p78 = por %p76, %p77
      %p80 = scmp.ne.s32.totalorder %s65, %s79
      %p81 = scmp.eq.s32.totalorder %s22, 0
      %p82 = por %p80, %p81
      %s84 = sadd.s32 %s83, 1
      %p87 = scmp.eq.s32.totalorder %s16, 1
      %p88 = scmp.ne.s32.totalorder %s83, %s85
      %p89 = scmp.eq.s32.totalorder %s16, 0
      %p90 = por %p88, %p89
      %p91 = scmp.ne.s32.totalorder %s83, %s85
      %p92 = scmp.eq.s32.totalorder %s21, 1
      %p93 = por %p91, %p92
      %p94 = scmp.ne.s32.totalorder %s85, %s86
      %p95 = scmp.eq.s32.totalorder %s21, 0
      %p96 = por %p94, %p95
      %p97 = scmp.ne.s32.totalorder %s85, %s86
      %p98 = scmp.eq.s32.totalorder %s22, 1
      %p99 = por %p97, %p98
      %p101 = scmp.ne.s32.totalorder %s86, %s100
      %p102 = scmp.eq.s32.totalorder %s22, 0
      %p103 = por %p101, %p102
      %s104 = ssub.s32 %s23, %s35
      %s105 = ssub.s32 %s24, %s31
      %s106 = sor.u32 %s104, %s105
      %p107 = scmp.eq.s32.totalorder %s106, 0
      %s109 = sadd.s32 %s108, 1
      %s110 = scalar_select %p107, %s108, %s109
      %p113 = pneg %p107
      %p114 = scmp.eq.s32.totalorder %s16, 1
      %p115 = por %p113, %p114
      %p116 = scmp.ne.s32.totalorder %s108, %s111
      %p117 = scmp.eq.s32.totalorder %s16, 0
      %p118 = por %p116, %p117
      %p119 = scmp.ne.s32.totalorder %s108, %s111
      %p120 = scmp.eq.s32.totalorder %s21, 1
      %p121 = por %p119, %p120
      %p122 = scmp.ne.s32.totalorder %s111, %s112
      %p123 = scmp.eq.s32.totalorder %s21, 0
      %p124 = por %p122, %p123
      %p125 = scmp.ne.s32.totalorder %s111, %s112
      %p126 = scmp.eq.s32.totalorder %s22, 1
      %p127 = por %p125, %p126
      %p129 = scmp.ne.s32.totalorder %s112, %s128
      %p130 = scmp.eq.s32.totalorder %s22, 0
      %p131 = por %p129, %p130
      %p132 = scmp.le.s32.totalorder 1, %s16
      %p133 = scmp.lt.s32.totalorder %s16, 3
      %p134 = pnand %p132, %p133
      %p135 = pneg %p134
      // Predicated region
      $region9: #{tpu_custom_call.1} parent=5 // pred_check
        _
      $region10: #{tpu_custom_call.1} parent=5 // pred_check_branch
        %137 = sbr.rel (%p134) target = $region12
      $region11: #{tpu_custom_call.1} parent=5 // pred_region
        %s138 = ssub.s32 %s16, 1
        // Predicated region
        $region13: #{tpu_custom_call.1} parent=11 // pred_check
          %p139 = pneg %p75
        $region14: #{tpu_custom_call.1} parent=11 // pred_check_branch
          %141 = sbr.rel (%p139) target = $region16
        $region15: #{tpu_custom_call.1} parent=11 // pred_region
          %s143 = ssub.s32 256, 256
          %144 = vsyncadd [#allocation6], %s143
          %s145 = sshll.u32 [#allocation5], 4
          %s146 = int_to_ptr.vmem [resolvable:$true] %s145
          %151 = dma.hbm_to_vmem [thread:$0]  %s1, 256, %s146, [#allocation6], 64, 64, 4
        $region16: #{tpu_custom_call.1} parent=11 // pred_fallthru
          _
        // Predicated region
        $region17: #{tpu_custom_call.1} parent=11 // pred_check
          %p152 = pneg %p96
        $region18: #{tpu_custom_call.1} parent=11 // pred_check_branch
          %154 = sbr.rel (%p152) target = $region20
        $region19: #{tpu_custom_call.1} parent=11 // pred_region
          _
        $region20: #{tpu_custom_call.1} parent=11 // pred_fallthru
          _
      $region12: #{tpu_custom_call.1} parent=5 // pred_fallthru
        _
      %p155 = scmp.lt.s32.totalorder %s16, 2
      // Predicated region
      $region21: #{tpu_custom_call.1} parent=5 // pred_check
        %p156 = pneg %p155
      $region22: #{tpu_custom_call.1} parent=5 // pred_check_branch
        %158 = sbr.rel (%p156) target = $region24
      $region23: #{tpu_custom_call.1} parent=5 // pred_region
        // Predicated region
        $region25: #{tpu_custom_call.1} parent=23 // pred_check
          %p159 = pneg %p48
        $region26: #{tpu_custom_call.1} parent=23 // pred_check_branch
          %161 = sbr.rel (%p159) target = $region28
        $region27: #{tpu_custom_call.1} parent=23 // pred_region
          %s162 = sand.u32 %s38, 1
          %s163 = scalar_lea.sflag [#allocation3], %s162
          %s164 = sand.u32 %s38, 1
          %s165 = smul.addr %s164, 16
          %s166 = scalar_lea.vmem [#allocation2], %s165
          %s168 = ssub.s32 256, 256
          %169 = vsyncadd %s163, %s168
          %s170 = smul.addr %s23, 4
          %s171 = smul.addr %s170, 64
          %s172 = scalar_lea.hbm %s0, %s171
          %s173 = sshll.u32 %s166, 4
          %s174 = int_to_ptr.vmem [resolvable:$true] %s173
          %179 = dma.hbm_to_vmem [thread:$0]  %s172, 256, %s174, %s163, 128, 128, 8
        $region28: #{tpu_custom_call.1} parent=23 // pred_fallthru
          _
      $region24: #{tpu_custom_call.1} parent=5 // pred_fallthru
        _
      %p180 = scmp.le.s32.totalorder 1, %s16
      %p181 = scmp.lt.s32.totalorder %s16, 3
      %p182 = pnand %p180, %p181
      %p183 = pneg %p182
      // Predicated region
      $region29: #{tpu_custom_call.1} parent=5 // pred_check
        _
      $region30: #{tpu_custom_call.1} parent=5 // pred_check_branch
        %185 = sbr.rel (%p182) target = $region32
      $region31: #{tpu_custom_call.1} parent=5 // pred_region
        %s186 = ssub.s32 %s16, 1
        %s187 = sand.u32 %s41, 1
        %s188 = scalar_lea.sflag [#allocation3], %s187
        %s189 = sand.u32 %s41, 1
        %s190 = smul.addr %s189, 16
        %s191 = scalar_lea.vmem [#allocation2], %s190
        // Predicated region
        $region33: #{tpu_custom_call.1} parent=31 // pred_check
          %p192 = pneg %p54
        $region34: #{tpu_custom_call.1} parent=31 // pred_check_branch
          %194 = sbr.rel (%p192) target = $region36
        $region35: #{tpu_custom_call.1} parent=31 // pred_region
          %195 = dma.done %s188, 256
        $region36: #{tpu_custom_call.1} parent=31 // pred_fallthru
          _
        // Predicated region
        $region37: #{tpu_custom_call.1} parent=31 // pred_check
          %p196 = pneg %p75
        $region38: #{tpu_custom_call.1} parent=31 // pred_check_branch
          %198 = sbr.rel (%p196) target = $region40
        $region39: #{tpu_custom_call.1} parent=31 // pred_region
          %199 = dma.done [#allocation6], 256
        $region40: #{tpu_custom_call.1} parent=31 // pred_fallthru
          _
        %s200 = sand.u32 %s41, 1
        %s201 = scalar_lea.sflag [#allocation3], %s200
        %s202 = sand.u32 %s41, 1
        %s203 = smul.addr %s202, 16
        %s204 = scalar_lea.vmem [#allocation2], %s203
        %p205 = pneg %p54
        %p206 = pneg %p51
        %p207 = pneg %p75
        %p208 = pneg %p72
        %p209 = pneg %p96
        %p210 = pneg %p93
        %p211 = pneg %p124
        %p212 = pneg %p121
        %s213 = sand.u32 %s111, 1
        %s214 = scalar_lea.sflag [#allocation4], %s213
        %s215 = sand.u32 %s111, 1
        %s216 = smul.addr %s215, 4
        %s217 = scalar_lea.vmem [#allocation7], %s216
        %v219 = vld [vmem:[#allocation5] sm:$0xf]
        %v220 = vld [vmem:[%s191] sm:$0xf]
        %v221 = vld [vmem:[%s191 + $0x8] sm:$0xf]
        %s222 = scalar_lea.vmem [#allocation5], 4
        %v223 = vld [vmem:[%s222] sm:$0xf]
        %v224 = vld [vmem:[%s191] sm:$0xff]
        %v225 = vld [vmem:[%s191 + $0x8] sm:$0xff]
        %v228 = vunpack.c.l.b16 %v224
        %v229 = vunpack.c.h.b16 %v224
        %v230 = vunpack.c.l.b16 %v225
        %v231 = vunpack.c.h.b16 %v225
        %v232 = vpack.c.b16 %v230, %v228
        %v233 = vpack.c.b16 %v231, %v229
        %234 = vrot.lane.b32.xlu0 %v232, 127
        %v235 = vpop.permute.xlu0 %234
        %236 = vrot.lane.b32.xlu0 %v233, 127
        %v237 = vpop.permute.xlu0 %236
        %vm238 = vcmask 1039360
        %v239 = vsel %vm238, %v235, %v237
        %vm241 = vcmask 130048
        %v243 = vsel %vm241, %v223, 0
        %245 = vmatprep.subr.bf16.mxu0 0
        %246 = vmatpush1.bf16.msra.mxu0 %v239
        %247 = vmatprep.subr.bf16.mxu0 0
        %248 = vmatpush1.bf16.msra.mxu0 0
        %249 = vmatprep.subr.bf16.mxu0 0
        %250 = vmatpush1.bf16.msra.mxu0 0
        %251 = vmatprep.subr.bf16.mxu0 0
        %252 = vmatpush1.bf16.msra.mxu0 0
        %253 = vmatprep.subr.bf16.mxu0 0
        %254 = vmatpush1.bf16.msra.mxu0 0
        %255 = vmatprep.subr.bf16.mxu0 0
        %256 = vmatpush1.bf16.msra.mxu0 0
        %257 = vmatprep.subr.bf16.mxu0 0
        %258 = vmatpush1.bf16.msra.mxu0 0
        %259 = vmatprep.subr.bf16.mxu0 0
        %260 = vmatpush1.bf16.msra.mxu0 0
        %261 = vmatprep.subr.bf16.mxu0 0
        %262 = vmatpush1.bf16.msra.mxu0 0
        %263 = vmatprep.subr.bf16.mxu0 0
        %264 = vmatpush1.bf16.msra.mxu0 0
        %265 = vmatprep.subr.bf16.mxu0 0
        %266 = vmatpush1.bf16.msra.mxu0 0
        %267 = vmatprep.subr.bf16.mxu0 0
        %268 = vmatpush1.bf16.msra.mxu0 0
        %269 = vmatprep.subr.bf16.mxu0 0
        %270 = vmatpush1.bf16.msra.mxu0 0
        %271 = vmatprep.subr.bf16.mxu0 0
        %272 = vmatpush1.bf16.msra.mxu0 0
        %273 = vmatprep.subr.bf16.mxu0 0
        %274 = vmatpush1.bf16.msra.mxu0 0
        %275 = vmatprep.subr.bf16.mxu0 0
        %276 = vmatpush1.bf16.msra.mxu0 0
        %277 = vmatprep.mubr.bf16.mxu0 0
        %278 = vmatmul.mubr.bf16.gmra.mrb[0].mxu0 %v243
        %v279 = vpop.f32.mrb[0].mxu0
        %v280 = vadd.f32 0.0, %v279
        %v281 = vpop.f32.mrb[0].mxu0
        %v282 = vpop.f32.mrb[0].mxu0
        %v283 = vpop.f32.mrb[0].mxu0
        %284 = vdwg.mxu0
        %v287 = vunpack.c.l.b16 %v220
        %v288 = vunpack.c.l.b16 %v221
        %v289 = vpack.c.b16 %v288, %v287
        %v292 = vsel %vm241, %v219, 0
        %294 = vmatprep.subr.bf16.mxu0 0
        %295 = vmatpush1.bf16.msra.mxu0 %v289
        %296 = vmatprep.subr.bf16.mxu0 0
        %297 = vmatpush1.bf16.msra.mxu0 0
        %298 = vmatprep.subr.bf16.mxu0 0
        %299 = vmatpush1.bf16.msra.mxu0 0
        %300 = vmatprep.subr.bf16.mxu0 0
        %301 = vmatpush1.bf16.msra.mxu0 0
        %302 = vmatprep.subr.bf16.mxu0 0
        %303 = vmatpush1.bf16.msra.mxu0 0
        %304 = vmatprep.subr.bf16.mxu0 0
        %305 = vmatpush1.bf16.msra.mxu0 0
        %306 = vmatprep.subr.bf16.mxu0 0
        %307 = vmatpush1.bf16.msra.mxu0 0
        %308 = vmatprep.subr.bf16.mxu0 0
        %309 = vmatpush1.bf16.msra.mxu0 0
        %310 = vmatprep.subr.bf16.mxu0 0
        %311 = vmatpush1.bf16.msra.mxu0 0
        %312 = vmatprep.subr.bf16.mxu0 0
        %313 = vmatpush1.bf16.msra.mxu0 0
        %314 = vmatprep.subr.bf16.mxu0 0
        %315 = vmatpush1.bf16.msra.mxu0 0
        %316 = vmatprep.subr.bf16.mxu0 0
        %317 = vmatpush1.bf16.msra.mxu0 0
        %318 = vmatprep.subr.bf16.mxu0 0
        %319 = vmatpush1.bf16.msra.mxu0 0
        %320 = vmatprep.subr.bf16.mxu0 0
        %321 = vmatpush1.bf16.msra.mxu0 0
        %322 = vmatprep.subr.bf16.mxu0 0
        %323 = vmatpush1.bf16.msra.mxu0 0
        %324 = vmatprep.subr.bf16.mxu0 0
        %325 = vmatpush1.bf16.msra.mxu0 0
        %326 = vmatprep.mubr.bf16.mxu0 0
        %327 = vmatmul.mubr.bf16.gmra.mrb[0].mxu0 %v292
        %v328 = vpop.f32.mrb[0].mxu0
        %v329 = vadd.f32 %v280, %v328
        %v330 = vpop.f32.mrb[0].mxu0
        %v331 = vpop.f32.mrb[0].mxu0
        %v332 = vpop.f32.mrb[0].mxu0
        %333 = vdwg.mxu0
        %s334 = scalar_lea.vmem [#allocation5], 8
        %v335 = vld [vmem:[%s334] sm:$0xf]
        %336 = vrot.lane.b32.xlu0 %v232, 119
        %v337 = vpop.permute.xlu0 %336
        %338 = vrot.lane.b32.xlu0 %v233, 119
        %v339 = vpop.permute.xlu0 %338
        %vm340 = vcmask 973824
        %v341 = vsel %vm340, %v337, %v339
        %v344 = vsel %vm241, %v335, 0
        %346 = vmatprep.subr.bf16.mxu0 0
        %347 = vmatpush1.bf16.msra.mxu0 %v341
        %348 = vmatprep.subr.bf16.mxu0 0
        %349 = vmatpush1.bf16.msra.mxu0 0
        %350 = vmatprep.subr.bf16.mxu0 0
        %351 = vmatpush1.bf16.msra.mxu0 0
        %352 = vmatprep.subr.bf16.mxu0 0
        %353 = vmatpush1.bf16.msra.mxu0 0
        %354 = vmatprep.subr.bf16.mxu0 0
        %355 = vmatpush1.bf16.msra.mxu0 0
        %356 = vmatprep.subr.bf16.mxu0 0
        %357 = vmatpush1.bf16.msra.mxu0 0
        %358 = vmatprep.subr.bf16.mxu0 0
        %359 = vmatpush1.bf16.msra.mxu0 0
        %360 = vmatprep.subr.bf16.mxu0 0
        %361 = vmatpush1.bf16.msra.mxu0 0
        %362 = vmatprep.subr.bf16.mxu0 0
        %363 = vmatpush1.bf16.msra.mxu0 0
        %364 = vmatprep.subr.bf16.mxu0 0
        %365 = vmatpush1.bf16.msra.mxu0 0
        %366 = vmatprep.subr.bf16.mxu0 0
        %367 = vmatpush1.bf16.msra.mxu0 0
        %368 = vmatprep.subr.bf16.mxu0 0
        %369 = vmatpush1.bf16.msra.mxu0 0
        %370 = vmatprep.subr.bf16.mxu0 0
        %371 = vmatpush1.bf16.msra.mxu0 0
        %372 = vmatprep.subr.bf16.mxu0 0
        %373 = vmatpush1.bf16.msra.mxu0 0
        %374 = vmatprep.subr.bf16.mxu0 0
        %375 = vmatpush1.bf16.msra.mxu0 0
        %376 = vmatprep.subr.bf16.mxu0 0
        %377 = vmatpush1.bf16.msra.mxu0 0
        %378 = vmatprep.mubr.bf16.mxu0 0
        %379 = vmatmul.mubr.bf16.gmra.mrb[0].mxu0 %v344
        %v380 = vpop.f32.mrb[0].mxu0
        %v381 = vadd.f32 0.0, %v380
        %v382 = vpop.f32.mrb[0].mxu0
        %v383 = vpop.f32.mrb[0].mxu0
        %v384 = vpop.f32.mrb[0].mxu0
        %385 = vdwg.mxu0
        %v386 = vadd.f32 %v329, %v381
        %s387 = scalar_lea.vmem [#allocation5], 12
        %v388 = vld [vmem:[%s387] sm:$0xf]
        %389 = vrot.lane.b32.xlu0 %v232, 118
        %v390 = vpop.permute.xlu0 %389
        %391 = vrot.lane.b32.xlu0 %v233, 118
        %v392 = vpop.permute.xlu0 %391
        %vm393 = vcmask 965632
        %v394 = vsel %vm393, %v390, %v392
        %v397 = vsel %vm241, %v388, 0
        %399 = vmatprep.subr.bf16.mxu0 0
        %400 = vmatpush1.bf16.msra.mxu0 %v394
        %401 = vmatprep.subr.bf16.mxu0 0
        %402 = vmatpush1.bf16.msra.mxu0 0
        %403 = vmatprep.subr.bf16.mxu0 0
        %404 = vmatpush1.bf16.msra.mxu0 0
        %405 = vmatprep.subr.bf16.mxu0 0
        %406 = vmatpush1.bf16.msra.mxu0 0
        %407 = vmatprep.subr.bf16.mxu0 0
        %408 = vmatpush1.bf16.msra.mxu0 0
        %409 = vmatprep.subr.bf16.mxu0 0
        %410 = vmatpush1.bf16.msra.mxu0 0
        %411 = vmatprep.subr.bf16.mxu0 0
        %412 = vmatpush1.bf16.msra.mxu0 0
        %413 = vmatprep.subr.bf16.mxu0 0
        %414 = vmatpush1.bf16.msra.mxu0 0
        %415 = vmatprep.subr.bf16.mxu0 0
        %416 = vmatpush1.bf16.msra.mxu0 0
        %417 = vmatprep.subr.bf16.mxu0 0
        %418 = vmatpush1.bf16.msra.mxu0 0
        %419 = vmatprep.subr.bf16.mxu0 0
        %420 = vmatpush1.bf16.msra.mxu0 0
        %421 = vmatprep.subr.bf16.mxu0 0
        %422 = vmatpush1.bf16.msra.mxu0 0
        %423 = vmatprep.subr.bf16.mxu0 0
        %424 = vmatpush1.bf16.msra.mxu0 0
        %425 = vmatprep.subr.bf16.mxu0 0
        %426 = vmatpush1.bf16.msra.mxu0 0
        %427 = vmatprep.subr.bf16.mxu0 0
        %428 = vmatpush1.bf16.msra.mxu0 0
        %429 = vmatprep.subr.bf16.mxu0 0
        %430 = vmatpush1.bf16.msra.mxu0 0
        %431 = vmatprep.mubr.bf16.mxu0 0
        %432 = vmatmul.mubr.bf16.gmra.mrb[0].mxu0 %v397
        %v433 = vpop.f32.mrb[0].mxu0
        %v434 = vadd.f32 0.0, %v433
        %v435 = vpop.f32.mrb[0].mxu0
        %v436 = vpop.f32.mrb[0].mxu0
        %v437 = vpop.f32.mrb[0].mxu0
        %438 = vdwg.mxu0
        %v439 = vadd.f32 %v386, %v434
        %v440 = vld [vmem:[%s2] sm:$0x1]
        %v442 = vlaneseq
        %v443 = vshrl.u32 %v442, 7
        %v444 = vsub.s32 0, %v443
        %v445 = vrot.slane %v440, %v444
        %v447 = vmul.f32 %v439, %v445
        %448 = vadd.xlane.f32.xlu0 %v447
        %v449 = vpop.xlane.xlu0 %448
        %v450 = vmul.f32 %v449, 0.015625
        %v451 = vsub.f32 %v439, %v450
        %v452 = vmul.f32 %v451, %v445
        %v453 = vmul.f32 %v452, %v452
        %454 = vadd.xlane.f32.xlu0 %v453
        %v455 = vpop.xlane.xlu0 %454
        %v456 = vmul.f32 %v455, 0.015625
        %v457 = vadd.f32 %v456, 1e-05
        %v458 = vrsqrt.pop %v457
        %v459 = vmul.f32 %v451, %v458
        %v460 = vmul.f32 %v459, 0.2
        %v461 = vmax.f32 %v459, %v460
        %v462 = vpack.c.bf16 %v461, %v461
        %463 = vst [vmem:[%s217] sm:$0xf] %v462
        %s464 = sand.u32 %s111, 1
        %s465 = scalar_lea.sflag [#allocation4], %s464
        %s466 = sand.u32 %s111, 1
        %s467 = smul.addr %s466, 4
        %s468 = scalar_lea.vmem [#allocation7], %s467
        // Predicated region
        $region41: #{tpu_custom_call.1} parent=31 // pred_check
          %p469 = pneg %p121
        $region42: #{tpu_custom_call.1} parent=31 // pred_check_branch
          %471 = sbr.rel (%p469) target = $region44
        $region43: #{tpu_custom_call.1} parent=31 // pred_region
          %s473 = ssub.s32 64, 64
          %474 = vsyncadd %s465, %s473
          %s475 = sadd.s32 %s26, %s25
          %s476 = smul.addr %s475, 64
          %s477 = scalar_lea.hbm %s3, %s476
          %s479 = sshll.u32 %s468, 4
          %s480 = int_to_ptr.vmem [resolvable:$true] %s479
          %482 = dma.vmem_to_hbm [thread:$0]  %s480, 64, %s477, %s465
        $region44: #{tpu_custom_call.1} parent=31 // pred_fallthru
          _
      $region32: #{tpu_custom_call.1} parent=5 // pred_fallthru
        _
      %p483 = scmp.le.s32.totalorder 2, %s16
      // Predicated region
      $region45: #{tpu_custom_call.1} parent=5 // pred_check
        %p484 = pneg %p483
      $region46: #{tpu_custom_call.1} parent=5 // pred_check_branch
        %486 = sbr.rel (%p484) target = $region48
      $region47: #{tpu_custom_call.1} parent=5 // pred_region
        %s487 = ssub.s32 %s16, 2
        // Predicated region
        $region49: #{tpu_custom_call.1} parent=47 // pred_check
          %p488 = pneg %p127
        $region50: #{tpu_custom_call.1} parent=47 // pred_check_branch
          %490 = sbr.rel (%p488) target = $region52
        $region51: #{tpu_custom_call.1} parent=47 // pred_region
          %s491 = sand.u32 %s112, 1
          %s492 = scalar_lea.sflag [#allocation4], %s491
          %s493 = sand.u32 %s112, 1
          %s494 = smul.addr %s493, 4
          %s495 = scalar_lea.vmem [#allocation7], %s494
          %496 = dma.done %s492, 64
        $region52: #{tpu_custom_call.1} parent=47 // pred_fallthru
          _
      $region48: #{tpu_custom_call.1} parent=5 // pred_fallthru
        _
    $region6: #{tpu_custom_call.1} parent=1 // loop_footer
      %s20 = sadd.s32 1, %s16
    $region7: #{tpu_custom_call.1} parent=1 // loop_footer_branch
      %15 = sbr.rel target = $region3
    $region8: #{tpu_custom_call.1} parent=1 // loop_exit
      _
    %497 = vsyncpa [#allocation3], 1
    %s498 = scalar_lea.sflag [#allocation3], 1
    %499 = vsyncpa %s498, 1
    %500 = vsyncpa [#allocation6], 1
    %501 = vsyncpa [#allocation4], 1
    %s502 = scalar_lea.sflag [#allocation4], 1
    %503 = vsyncpa %s502, 1

</llo_original>
